<compile_context>
chip_gen: v7x
topology: tpu7x:2x2x1
jax: 0.10.0
libtpu: 0.0.40
codegen_flags: <defaults>
</compile_context>

<pallas_src>
import jax
import jax.numpy as jnp
import numpy as np
from jax.experimental import pallas as pl
from jax.experimental.pallas import tpu as pltpu


# ----------------------------------------------------------------------------
# Problem constants (hps.f_width = 32, hps.f_depth = 2; synthetic nz = 16)
# ----------------------------------------------------------------------------
NZ = 16
HALF = NZ // 2
WIDTH = 32

# Slab A (lane width = WIDTH = 32): coupling-MLP parameters.
A_W1 = 0                      # rows [0:16)   W1'' = Wp[:, :HALF] @ w1_folded     [NZ, WIDTH]
A_W2 = A_W1 + NZ              # rows [16:48)  W2'  = w2 * exp(3*logs2)            [WIDTH, WIDTH]
A_B = A_W2 + WIDTH            # row 48: b1''  ; row 49: b2'
A_ROWS = A_B + 8              # 56 rows / step  (56*32*4 = 7 KiB)

# Slab B (lane width = NZ = 16): nz-wide parameters (all lane-aligned).
B_WP = 0                      # rows [0:16)   Wp = diag(exp(3*logs_an)) @ w_perm  [NZ, NZ]
B_WSH = B_WP + NZ             # rows [16:48)  shift weights on lanes [HALF:NZ), zeros elsewhere
B_WSC = B_WSH + WIDTH         # rows [48:80)  scale-logit weights on lanes [HALF:NZ), zeros else
B_B = B_WSC + WIDTH           # row 80: cb (1x1conv bias + shift bias) ; row 81: logit bias
                              # row 82, col 0 (step-0 section only): total constant logdet inc.
B_ROWS = B_B + 8              # 88 rows / step  (88*16*4 = 5.5 KiB)


# ----------------------------------------------------------------------------
# Single fused Pallas kernel: no grid, depth statically unrolled, z/ld carried
# as traced values.
# ----------------------------------------------------------------------------
def revnet2d_fused_kernel(z_ref, ld_ref, a_ref, b_ref, z_out_ref, ld_out_ref):
    f32 = jnp.float32
    depth = a_ref.shape[0] // A_ROWS

    z = z_ref[...]                                           # [B, NZ]
    # total constant logdet increment over all steps, added once
    ld = ld_ref[...] + b_ref[B_B + 2:B_B + 3, 0:1]           # [B, 1]

    for d in range(depth):                                   # static unroll (depth = 2)
        a0 = d * A_ROWS
        b0 = d * B_ROWS
        w1 = a_ref[a0 + A_W1:a0 + A_W1 + NZ, :]              # [NZ, WIDTH]
        w2 = a_ref[a0 + A_W2:a0 + A_W2 + WIDTH, :]           # [WIDTH, WIDTH]
        b1 = a_ref[a0 + A_B:a0 + A_B + 1, :]                 # [1, WIDTH]
        b2 = a_ref[a0 + A_B + 1:a0 + A_B + 2, :]             # [1, WIDTH]
        wp = b_ref[b0 + B_WP:b0 + B_WP + NZ, :]              # [NZ, NZ]
        wsh = b_ref[b0 + B_WSH:b0 + B_WSH + WIDTH, :]        # [WIDTH, NZ]
        wsc = b_ref[b0 + B_WSC:b0 + B_WSC + WIDTH, :]        # [WIDTH, NZ]
        cb = b_ref[b0 + B_B:b0 + B_B + 1, :]                 # [1, NZ]
        bsc = b_ref[b0 + B_B + 1:b0 + B_B + 2, :]            # [1, NZ]

        # coupling MLP `f` (fc_1+actnorm+relu, fc_2+actnorm+relu) runs directly
        # off z: the z1-half of the actnorm+1x1conv weight is folded into w1.
        h = jnp.maximum(jnp.dot(z, w1, preferred_element_type=f32) + b1, 0.0)
        h = jnp.maximum(jnp.dot(h, w2, preferred_element_type=f32) + b2, 0.0)

        # actnorm + 1x1 conv (z @ Wp, independent of the MLP chain) plus the
        # lane-aligned shift from fc_zeros; scale logits also lane-aligned.
        zc = (jnp.dot(z, wp, preferred_element_type=f32)
              + jnp.dot(h, wsh, preferred_element_type=f32) + cb)
        logit = jnp.dot(h, wsc, preferred_element_type=f32) + bsc

        scale = jax.nn.sigmoid(logit)                        # == 1.0 on z1 lanes (logit = +30)
        # stable log(sigmoid(x)) = min(x,0) - log(1 + exp(-|x|));  0.0 on z1 lanes
        logscale = jnp.minimum(logit, 0.0) - jnp.log(1.0 + jnp.exp(-jnp.abs(logit)))

        z = zc * scale                                       # full-vector update, no lane splits
        ld = ld + jnp.sum(logscale, axis=1, keepdims=True)

    z_out_ref[...] = z
    ld_out_ref[...] = ld


# ----------------------------------------------------------------------------
# Wrapper: one pallas_call, no grid, everything resident in VMEM
# ----------------------------------------------------------------------------
def revnet2d_forward_fused(z, logdet_col, slab_a, slab_b):
    """z: [B, NZ] f32 (B multiple of 8), logdet_col: [B, 1] f32,
    slab_a: [depth*A_ROWS, WIDTH] f32, slab_b: [depth*B_ROWS, NZ] f32."""
    B = z.shape[0]
    assert B % 8 == 0, "batch must be a multiple of 8 (f32 sublane tile)"
    z_out, ld_out = pl.pallas_call(
        revnet2d_fused_kernel,
        out_shape=(
            jax.ShapeDtypeStruct((B, NZ), jnp.float32),
            jax.ShapeDtypeStruct((B, 1), jnp.float32),
        ),
        in_specs=[
            pl.BlockSpec(memory_space=pltpu.MemorySpace.VMEM),
            pl.BlockSpec(memory_space=pltpu.MemorySpace.VMEM),
            pl.BlockSpec(memory_space=pltpu.MemorySpace.VMEM),
            pl.BlockSpec(memory_space=pltpu.MemorySpace.VMEM),
        ],
        out_specs=(
            pl.BlockSpec(memory_space=pltpu.MemorySpace.VMEM),
            pl.BlockSpec(memory_space=pltpu.MemorySpace.VMEM),
        ),
    )(z, logdet_col, slab_a, slab_b)
    return z_out, ld_out


# ----------------------------------------------------------------------------
# One-time parameter preprocessing (glue): constant folding + compact packing
# ----------------------------------------------------------------------------
def pack_step_params(p):
    s_an = jnp.exp(p["logs_an"] * 3.0)                       # [1, NZ]
    wp = p["w_perm"] * s_an.reshape(NZ, 1)                   # diag(s_an) @ w_perm
    cp = (p["b_an"] * s_an) @ p["w_perm"]                    # [1, NZ]
    _, logabsdet = jnp.linalg.slogdet(p["w_perm"])
    dld = jnp.sum(p["logs_an"] * 3.0) + logabsdet            # constant logdet increment

    s1 = jnp.exp(p["logs1"] * 3.0)
    w1f, b1f = p["w1"] * s1, p["b1"] * s1
    w1pp = wp[:, :HALF] @ w1f                                # fold Wp z1-half into fc_1
    b1pp = cp[:, :HALF] @ w1f + b1f

    s2 = jnp.exp(p["logs2"] * 3.0)
    w2p, b2p = p["w2"] * s2, p["b2"] * s2

    sz = jnp.exp(p["logsz"] * 3.0)
    wzf, bzf = p["wz"] * sz, p["bz"] * sz
    # shift -> lanes [HALF:NZ) (aligned with z2); scale logit -> its own matrix,
    # z1 lanes get zero weight and bias +30 so sigmoid==1, log(sigmoid)==0.
    wsh = jnp.zeros((WIDTH, NZ), jnp.float32).at[:, HALF:].set(wzf[:, 0::2])
    wsc = jnp.zeros((WIDTH, NZ), jnp.float32).at[:, HALF:].set(wzf[:, 1::2])
    cb = cp.at[:, HALF:].add(bzf[:, 0::2])                   # 1x1conv bias + shift bias
    bsc = jnp.full((1, NZ), 30.0, jnp.float32).at[:, HALF:].set(bzf[:, 1::2] + 2.0)

    slab_a = jnp.zeros((A_ROWS, WIDTH), jnp.float32)
    slab_a = slab_a.at[A_W1:A_W1 + NZ, :].set(w1pp)
    slab_a = slab_a.at[A_W2:A_W2 + WIDTH, :].set(w2p)
    slab_a = slab_a.at[A_B, :].set(b1pp[0])
    slab_a = slab_a.at[A_B + 1, :].set(b2p[0])

    slab_b = jnp.zeros((B_ROWS, NZ), jnp.float32)
    slab_b = slab_b.at[B_WP:B_WP + NZ, :].set(wp)
    slab_b = slab_b.at[B_WSH:B_WSH + WIDTH, :].set(wsh)
    slab_b = slab_b.at[B_WSC:B_WSC + WIDTH, :].set(wsc)
    slab_b = slab_b.at[B_B, :].set(cb[0])
    slab_b = slab_b.at[B_B + 1, :].set(bsc[0])
    return slab_a, slab_b, dld


def preprocess_params(params_list):
    packs = [pack_step_params(p) for p in params_list]
    slab_a = jnp.concatenate([a for a, _, _ in packs], axis=0)
    slab_b = jnp.concatenate([b for _, b, _ in packs], axis=0)
    dld_total = sum((d for _, _, d in packs), jnp.float32(0.0))
    slab_b = slab_b.at[B_B + 2, 0].set(dld_total)            # stored in the step-0 section
    return slab_a, slab_b


# ----------------------------------------------------------------------------
# Deterministic parameter init (shapes from the PyTorch __init__)
# ----------------------------------------------------------------------------
def init_step_params(key, nz, width):
    half = nz // 2
    ks = jax.random.split(key, 12)
    n = lambda k, s: (jax.random.normal(k, s, dtype=jnp.float32) * 0.05)
    w_perm = jnp.linalg.qr(jax.random.normal(ks[2], (nz, nz), dtype=jnp.float32))[0]
    return dict(
        b_an=n(ks[0], (1, nz)), logs_an=n(ks[1], (1, nz)),
        w_perm=w_perm.astype(jnp.float32),
        w1=n(ks[3], (half, width)), b1=n(ks[4], (1, width)), logs1=n(ks[5], (1, width)),
        w2=n(ks[6], (width, width)), b2=n(ks[7], (1, width)), logs2=n(ks[8], (1, width)),
        # fc_zeros params are zeros in the PyTorch __init__; small deterministic
        # random values here so the coupling math is actually exercised.
        wz=n(ks[9], (width, nz)), bz=n(ks[10], (1, nz)), logsz=n(ks[11], (1, nz)),
    )


# ----------------------------------------------------------------------------
# Pure-JAX reference (mirrors the PyTorch forward) for correctness checking
# ----------------------------------------------------------------------------
def revnet2d_reference(z, logdet, params_list):
    ld = logdet.astype(jnp.float32)
    for p in params_list:
        nz = z.shape[-1]
        half = nz // 2
        # actnorm
        logs = p["logs_an"] * 3.0
        z = (z + p["b_an"]) * jnp.exp(logs)
        ld = ld + jnp.sum(logs)
        # invertible 1x1 conv
        z = z @ p["w_perm"]
        _, logabsdet = jnp.linalg.slogdet(p["w_perm"])
        ld = ld + logabsdet
        # affine coupling; coupling network = PyTorch module `f`
        z1, z2 = z[:, :half], z[:, half:]
        h = jnp.maximum((z1 @ p["w1"] + p["b1"]) * jnp.exp(p["logs1"] * 3.0), 0.0)
        h = jnp.maximum((h @ p["w2"] + p["b2"]) * jnp.exp(p["logs2"] * 3.0), 0.0)
        h = (h @ p["wz"] + p["bz"]) * jnp.exp(p["logsz"] * 3.0)
        shift = h[:, 0::2]
        scale = jax.nn.sigmoid(h[:, 1::2] + 2.0)
        z2 = (z2 + shift) * scale
        ld = ld + jnp.sum(jnp.log(scale), axis=1)
        z = jnp.concatenate([z1, z2], axis=1)
    return z, ld


if __name__ == "__main__":
    B, depth = 8, 2   # hps.f_width=32, hps.f_depth=2, synthetic nz=16
    key = jax.random.PRNGKey(0)
    kz, kp = jax.random.split(key)
    z = jax.random.normal(kz, (B, NZ), dtype=jnp.float32)
    logdet = jnp.zeros((B,), dtype=jnp.float32)
    params_list = [init_step_params(k, NZ, WIDTH) for k in jax.random.split(kp, depth)]

    # One-time glue (outside the hot path): constant folding + slab packing.
    slab_a, slab_b = preprocess_params(params_list)
    jax.block_until_ready((slab_a, slab_b))

    forward = jax.jit(revnet2d_forward_fused)
    z_out, ld_out = forward(z, logdet.reshape(B, 1), slab_a, slab_b)
    jax.block_until_ready((z_out, ld_out))

    z_ref, ld_ref = revnet2d_reference(z, logdet, params_list)
    np.testing.assert_allclose(np.asarray(z_out), np.asarray(z_ref), rtol=1e-4, atol=1e-4)
    np.testing.assert_allclose(np.asarray(ld_out[:, 0]), np.asarray(ld_ref), rtol=1e-4, atol=1e-4)
    print("KERNEL_OK")
</pallas_src>

<mosaic_0001>
module attributes {stable_mosaic.version = 11 : i64} {
  func.func @revnet2d_fused_kernel(%arg0: memref<8x16xf32, #tpu.memory_space<vmem>>, %arg1: memref<8x1xf32, #tpu.memory_space<vmem>>, %arg2: memref<112x32xf32, #tpu.memory_space<vmem>>, %arg3: memref<176x16xf32, #tpu.memory_space<vmem>>, %arg4: memref<8x16xf32, #tpu.memory_space<vmem>>, %arg5: memref<8x1xf32, #tpu.memory_space<vmem>>) attributes {dimension_semantics = [], scalar_prefetch = 0 : i64, scratch_operands = 0 : i64, tpu.core_type = #tpu.core_type<tc>} {
    %c0 = arith.constant 0 : index
    %c0_0 = arith.constant 0 : index
    %0 = vector.load %arg0[%c0, %c0_0] : memref<8x16xf32, #tpu.memory_space<vmem>>, vector<8x16xf32>
    %c0_1 = arith.constant 0 : index
    %c0_2 = arith.constant 0 : index
    %1 = vector.load %arg1[%c0_1, %c0_2] : memref<8x1xf32, #tpu.memory_space<vmem>>, vector<8x1xf32>
    %c82 = arith.constant 82 : index
    %c0_3 = arith.constant 0 : index
    %2 = vector.load %arg3[%c82, %c0_3] : memref<176x16xf32, #tpu.memory_space<vmem>>, vector<1x1xf32>
    %3 = vector.broadcast %2 : vector<1x1xf32> to vector<8x1xf32>
    %4 = arith.addf %1, %3 : vector<8x1xf32>
    %c0_4 = arith.constant 0 : index
    %c0_5 = arith.constant 0 : index
    %5 = vector.load %arg2[%c0_4, %c0_5] : memref<112x32xf32, #tpu.memory_space<vmem>>, vector<16x32xf32>
    %c16 = arith.constant 16 : index
    %c0_6 = arith.constant 0 : index
    %6 = vector.load %arg2[%c16, %c0_6] : memref<112x32xf32, #tpu.memory_space<vmem>>, vector<32x32xf32>
    %c48 = arith.constant 48 : index
    %c0_7 = arith.constant 0 : index
    %7 = vector.load %arg2[%c48, %c0_7] : memref<112x32xf32, #tpu.memory_space<vmem>>, vector<1x32xf32>
    %c49 = arith.constant 49 : index
    %c0_8 = arith.constant 0 : index
    %8 = vector.load %arg2[%c49, %c0_8] : memref<112x32xf32, #tpu.memory_space<vmem>>, vector<1x32xf32>
    %c0_9 = arith.constant 0 : index
    %c0_10 = arith.constant 0 : index
    %9 = vector.load %arg3[%c0_9, %c0_10] : memref<176x16xf32, #tpu.memory_space<vmem>>, vector<16x16xf32>
    %c16_11 = arith.constant 16 : index
    %c0_12 = arith.constant 0 : index
    %10 = vector.load %arg3[%c16_11, %c0_12] : memref<176x16xf32, #tpu.memory_space<vmem>>, vector<32x16xf32>
    %c48_13 = arith.constant 48 : index
    %c0_14 = arith.constant 0 : index
    %11 = vector.load %arg3[%c48_13, %c0_14] : memref<176x16xf32, #tpu.memory_space<vmem>>, vector<32x16xf32>
    %c80 = arith.constant 80 : index
    %c0_15 = arith.constant 0 : index
    %12 = vector.load %arg3[%c80, %c0_15] : memref<176x16xf32, #tpu.memory_space<vmem>>, vector<1x16xf32>
    %c81 = arith.constant 81 : index
    %c0_16 = arith.constant 0 : index
    %13 = vector.load %arg3[%c81, %c0_16] : memref<176x16xf32, #tpu.memory_space<vmem>>, vector<1x16xf32>
    %cst = arith.constant dense<0.000000e+00> : vector<8x32xf32>
    %14 = tpu.matmul %0, %5, %cst {dimension_numbers = #tpu.dot_dimension_numbers<[1], [0], [0], [1], [0, 0, 1, 1], [], []>} : vector<8x16xf32>, vector<16x32xf32>, vector<8x32xf32> -> vector<8x32xf32>
    %15 = vector.broadcast %7 : vector<1x32xf32> to vector<8x32xf32>
    %16 = arith.addf %14, %15 : vector<8x32xf32>
    %cst_17 = arith.constant 0.000000e+00 : f32
    %17 = vector.broadcast %cst_17 : f32 to vector<8x32xf32>
    %18 = arith.maximumf %16, %17 : vector<8x32xf32>
    %cst_18 = arith.constant dense<0.000000e+00> : vector<8x32xf32>
    %19 = tpu.matmul %18, %6, %cst_18 {dimension_numbers = #tpu.dot_dimension_numbers<[1], [0], [0], [1], [0, 0, 1, 1], [], []>} : vector<8x32xf32>, vector<32x32xf32>, vector<8x32xf32> -> vector<8x32xf32>
    %20 = vector.broadcast %8 : vector<1x32xf32> to vector<8x32xf32>
    %21 = arith.addf %19, %20 : vector<8x32xf32>
    %cst_19 = arith.constant 0.000000e+00 : f32
    %22 = vector.broadcast %cst_19 : f32 to vector<8x32xf32>
    %23 = arith.maximumf %21, %22 : vector<8x32xf32>
    %cst_20 = arith.constant dense<0.000000e+00> : vector<8x16xf32>
    %24 = tpu.matmul %0, %9, %cst_20 {dimension_numbers = #tpu.dot_dimension_numbers<[1], [0], [0], [1], [0, 0, 1, 1], [], []>} : vector<8x16xf32>, vector<16x16xf32>, vector<8x16xf32> -> vector<8x16xf32>
    %cst_21 = arith.constant dense<0.000000e+00> : vector<8x16xf32>
    %25 = tpu.matmul %23, %10, %cst_21 {dimension_numbers = #tpu.dot_dimension_numbers<[1], [0], [0], [1], [0, 0, 1, 1], [], []>} : vector<8x32xf32>, vector<32x16xf32>, vector<8x16xf32> -> vector<8x16xf32>
    %26 = arith.addf %24, %25 : vector<8x16xf32>
    %27 = vector.broadcast %12 : vector<1x16xf32> to vector<8x16xf32>
    %28 = arith.addf %26, %27 : vector<8x16xf32>
    %cst_22 = arith.constant dense<0.000000e+00> : vector<8x16xf32>
    %29 = tpu.matmul %23, %11, %cst_22 {dimension_numbers = #tpu.dot_dimension_numbers<[1], [0], [0], [1], [0, 0, 1, 1], [], []>} : vector<8x32xf32>, vector<32x16xf32>, vector<8x16xf32> -> vector<8x16xf32>
    %30 = vector.broadcast %13 : vector<1x16xf32> to vector<8x16xf32>
    %31 = arith.addf %29, %30 : vector<8x16xf32>
    %32 = arith.negf %31 : vector<8x16xf32>
    %33 = math.exp %32 : vector<8x16xf32>
    %cst_23 = arith.constant 1.000000e+00 : f32
    %34 = vector.broadcast %cst_23 : f32 to vector<8x16xf32>
    %35 = arith.addf %34, %33 : vector<8x16xf32>
    %36 = arith.divf %34, %35 : vector<8x16xf32>
    %cst_24 = arith.constant 0.000000e+00 : f32
    %37 = vector.broadcast %cst_24 : f32 to vector<8x16xf32>
    %38 = arith.minimumf %31, %37 : vector<8x16xf32>
    %39 = math.absf %31 : vector<8x16xf32>
    %cst_25 = arith.constant 0.000000e+00 : f32
    %40 = vector.broadcast %cst_25 : f32 to vector<8x16xf32>
    %41 = arith.subf %40, %39 : vector<8x16xf32>
    %42 = math.exp %41 : vector<8x16xf32>
    %cst_26 = arith.constant 1.000000e+00 : f32
    %43 = vector.broadcast %cst_26 : f32 to vector<8x16xf32>
    %44 = arith.addf %43, %42 : vector<8x16xf32>
    %45 = math.log %44 : vector<8x16xf32>
    %46 = arith.subf %38, %45 : vector<8x16xf32>
    %47 = arith.mulf %28, %36 : vector<8x16xf32>
    %cst_27 = arith.constant dense<0.000000e+00> : vector<8xf32>
    %48 = vector.multi_reduction <add>, %46, %cst_27 [1] : vector<8x16xf32> to vector<8xf32>
    %49 = vector.shape_cast %48 : vector<8xf32> to vector<8x1xf32>
    %50 = arith.addf %4, %49 : vector<8x1xf32>
    %c56 = arith.constant 56 : index
    %c0_28 = arith.constant 0 : index
    %51 = vector.load %arg2[%c56, %c0_28] : memref<112x32xf32, #tpu.memory_space<vmem>>, vector<16x32xf32>
    %c72 = arith.constant 72 : index
    %c0_29 = arith.constant 0 : index
    %52 = vector.load %arg2[%c72, %c0_29] : memref<112x32xf32, #tpu.memory_space<vmem>>, vector<32x32xf32>
    %c104 = arith.constant 104 : index
    %c0_30 = arith.constant 0 : index
    %53 = vector.load %arg2[%c104, %c0_30] : memref<112x32xf32, #tpu.memory_space<vmem>>, vector<1x32xf32>
    %c105 = arith.constant 105 : index
    %c0_31 = arith.constant 0 : index
    %54 = vector.load %arg2[%c105, %c0_31] : memref<112x32xf32, #tpu.memory_space<vmem>>, vector<1x32xf32>
    %c88 = arith.constant 88 : index
    %c0_32 = arith.constant 0 : index
    %55 = vector.load %arg3[%c88, %c0_32] : memref<176x16xf32, #tpu.memory_space<vmem>>, vector<16x16xf32>
    %c104_33 = arith.constant 104 : index
    %c0_34 = arith.constant 0 : index
    %56 = vector.load %arg3[%c104_33, %c0_34] : memref<176x16xf32, #tpu.memory_space<vmem>>, vector<32x16xf32>
    %c136 = arith.constant 136 : index
    %c0_35 = arith.constant 0 : index
    %57 = vector.load %arg3[%c136, %c0_35] : memref<176x16xf32, #tpu.memory_space<vmem>>, vector<32x16xf32>
    %c168 = arith.constant 168 : index
    %c0_36 = arith.constant 0 : index
    %58 = vector.load %arg3[%c168, %c0_36] : memref<176x16xf32, #tpu.memory_space<vmem>>, vector<1x16xf32>
    %c169 = arith.constant 169 : index
    %c0_37 = arith.constant 0 : index
    %59 = vector.load %arg3[%c169, %c0_37] : memref<176x16xf32, #tpu.memory_space<vmem>>, vector<1x16xf32>
    %cst_38 = arith.constant dense<0.000000e+00> : vector<8x32xf32>
    %60 = tpu.matmul %47, %51, %cst_38 {dimension_numbers = #tpu.dot_dimension_numbers<[1], [0], [0], [1], [0, 0, 1, 1], [], []>} : vector<8x16xf32>, vector<16x32xf32>, vector<8x32xf32> -> vector<8x32xf32>
    %61 = vector.broadcast %53 : vector<1x32xf32> to vector<8x32xf32>
    %62 = arith.addf %60, %61 : vector<8x32xf32>
    %cst_39 = arith.constant 0.000000e+00 : f32
    %63 = vector.broadcast %cst_39 : f32 to vector<8x32xf32>
    %64 = arith.maximumf %62, %63 : vector<8x32xf32>
    %cst_40 = arith.constant dense<0.000000e+00> : vector<8x32xf32>
    %65 = tpu.matmul %64, %52, %cst_40 {dimension_numbers = #tpu.dot_dimension_numbers<[1], [0], [0], [1], [0, 0, 1, 1], [], []>} : vector<8x32xf32>, vector<32x32xf32>, vector<8x32xf32> -> vector<8x32xf32>
    %66 = vector.broadcast %54 : vector<1x32xf32> to vector<8x32xf32>
    %67 = arith.addf %65, %66 : vector<8x32xf32>
    %cst_41 = arith.constant 0.000000e+00 : f32
    %68 = vector.broadcast %cst_41 : f32 to vector<8x32xf32>
    %69 = arith.maximumf %67, %68 : vector<8x32xf32>
    %cst_42 = arith.constant dense<0.000000e+00> : vector<8x16xf32>
    %70 = tpu.matmul %47, %55, %cst_42 {dimension_numbers = #tpu.dot_dimension_numbers<[1], [0], [0], [1], [0, 0, 1, 1], [], []>} : vector<8x16xf32>, vector<16x16xf32>, vector<8x16xf32> -> vector<8x16xf32>
    %cst_43 = arith.constant dense<0.000000e+00> : vector<8x16xf32>
    %71 = tpu.matmul %69, %56, %cst_43 {dimension_numbers = #tpu.dot_dimension_numbers<[1], [0], [0], [1], [0, 0, 1, 1], [], []>} : vector<8x32xf32>, vector<32x16xf32>, vector<8x16xf32> -> vector<8x16xf32>
    %72 = arith.addf %70, %71 : vector<8x16xf32>
    %73 = vector.broadcast %58 : vector<1x16xf32> to vector<8x16xf32>
    %74 = arith.addf %72, %73 : vector<8x16xf32>
    %cst_44 = arith.constant dense<0.000000e+00> : vector<8x16xf32>
    %75 = tpu.matmul %69, %57, %cst_44 {dimension_numbers = #tpu.dot_dimension_numbers<[1], [0], [0], [1], [0, 0, 1, 1], [], []>} : vector<8x32xf32>, vector<32x16xf32>, vector<8x16xf32> -> vector<8x16xf32>
    %76 = vector.broadcast %59 : vector<1x16xf32> to vector<8x16xf32>
    %77 = arith.addf %75, %76 : vector<8x16xf32>
    %78 = arith.negf %77 : vector<8x16xf32>
    %79 = math.exp %78 : vector<8x16xf32>
    %cst_45 = arith.constant 1.000000e+00 : f32
    %80 = vector.broadcast %cst_45 : f32 to vector<8x16xf32>
    %81 = arith.addf %80, %79 : vector<8x16xf32>
    %82 = arith.divf %80, %81 : vector<8x16xf32>
    %cst_46 = arith.constant 0.000000e+00 : f32
    %83 = vector.broadcast %cst_46 : f32 to vector<8x16xf32>
    %84 = arith.minimumf %77, %83 : vector<8x16xf32>
    %85 = math.absf %77 : vector<8x16xf32>
    %cst_47 = arith.constant 0.000000e+00 : f32
    %86 = vector.broadcast %cst_47 : f32 to vector<8x16xf32>
    %87 = arith.subf %86, %85 : vector<8x16xf32>
    %88 = math.exp %87 : vector<8x16xf32>
    %cst_48 = arith.constant 1.000000e+00 : f32
    %89 = vector.broadcast %cst_48 : f32 to vector<8x16xf32>
    %90 = arith.addf %89, %88 : vector<8x16xf32>
    %91 = math.log %90 : vector<8x16xf32>
    %92 = arith.subf %84, %91 : vector<8x16xf32>
    %93 = arith.mulf %74, %82 : vector<8x16xf32>
    %cst_49 = arith.constant dense<0.000000e+00> : vector<8xf32>
    %94 = vector.multi_reduction <add>, %92, %cst_49 [1] : vector<8x16xf32> to vector<8xf32>
    %95 = vector.shape_cast %94 : vector<8xf32> to vector<8x1xf32>
    %96 = arith.addf %50, %95 : vector<8x1xf32>
    %c0_50 = arith.constant 0 : index
    %c0_51 = arith.constant 0 : index
    %97 = vector.load %arg4[%c0_50, %c0_51] : memref<8x16xf32, #tpu.memory_space<vmem>>, vector<8x16xf32>
    tpu.vector_store %arg4[%c0_50, %c0_51], %93 {strides = array<i32>} : memref<8x16xf32, #tpu.memory_space<vmem>>, vector<8x16xf32>,
    %c0_52 = arith.constant 0 : index
    %c0_53 = arith.constant 0 : index
    %98 = vector.load %arg5[%c0_52, %c0_53] : memref<8x1xf32, #tpu.memory_space<vmem>>, vector<8x1xf32>
    tpu.vector_store %arg5[%c0_52, %c0_53], %96 {strides = array<i32>} : memref<8x1xf32, #tpu.memory_space<vmem>>, vector<8x1xf32>,
    return
  }
}

</mosaic_0001>

<llo_original>
// kernel: revnet2d_forward_fused.1
$region0: #{revnet2d_forward_fused.1}
  #allocation0 [shape = 'u32[]', space=smem, size = 0x4, offset = 0x4, fixed_abs, tag = 'smem constant byte address 0x4 - core index']
  #allocation1 [shape = 'u32[144,128]{1,0:T(1,128)}', space=vmem, size = 0x12000, scoped, tag = 'internal scratch']
  %s0 = inlined_call_operand.vmem [shape: f32[8,16], index: 0, kind: input, shape index: {}]
  %s1 = inlined_call_operand.vmem [shape: f32[8,1], index: 1, kind: input, shape index: {}]
  %s2 = inlined_call_operand.vmem [shape: f32[112,32], index: 2, kind: input, shape index: {}]
  %s3 = inlined_call_operand.vmem [shape: f32[176,16], index: 3, kind: input, shape index: {}]
  %s4 = inlined_call_operand.hbm [shape: f32[8,16], index: 4, kind: output, shape index: {0}]
  %s5 = inlined_call_operand.vmem [shape: f32[8,1], index: 5, kind: output, shape index: {1}]
  %6 = xla_tuple %s4, %s5
  %s7 = sld [smem:[#allocation0]]
  $region34: #{revnet2d_forward_fused.1} parent=0
    _
  %s9 = ssub.s32 1, %s7
  %s10 = scalar_select 0, %s9, %s7
  $region1: #{revnet2d_forward_fused.1} parent=0
    #allocation2 [shape = 'u8[4096]{0}', space=vmem, size = 0x1000, scoped, tag = 'output window, operand 0, single buffered']
    #allocation3 [shape = 's32[1]{0}', space=sflag, size = 0x4, scoped, tag = 'scoped memory for revnet2d_forward_fused.1']
    %11 = vsyncpa [#allocation3], 0
    // Predicated region
    $region2: #{revnet2d_forward_fused.1} parent=1 // pred_check
      _
    $region3: #{revnet2d_forward_fused.1} parent=1 // pred_check_branch
      %13 = sbr.rel (0) target = $region5
    $region4: #{revnet2d_forward_fused.1} parent=1 // pred_region
      _
    $region5: #{revnet2d_forward_fused.1} parent=1 // pred_fallthru
      _
    // Predicated region
    $region6: #{revnet2d_forward_fused.1} parent=1 // pred_check
      _
    $region7: #{revnet2d_forward_fused.1} parent=1 // pred_check_branch
      %15 = sbr.rel (0) target = $region9
    $region8: #{revnet2d_forward_fused.1} parent=1 // pred_region
      _
    $region9: #{revnet2d_forward_fused.1} parent=1 // pred_fallthru
      _
    // Predicated region
    $region10: #{revnet2d_forward_fused.1} parent=1 // pred_check
      _
    $region11: #{revnet2d_forward_fused.1} parent=1 // pred_check_branch
      %17 = sbr.rel (0) target = $region13
    $region12: #{revnet2d_forward_fused.1} parent=1 // pred_region
      _
    $region13: #{revnet2d_forward_fused.1} parent=1 // pred_fallthru
      _
    // Predicated region
    $region14: #{revnet2d_forward_fused.1} parent=1 // pred_check
      _
    $region15: #{revnet2d_forward_fused.1} parent=1 // pred_check_branch
      %19 = sbr.rel (0) target = $region17
    $region16: #{revnet2d_forward_fused.1} parent=1 // pred_region
      _
    $region17: #{revnet2d_forward_fused.1} parent=1 // pred_fallthru
      _
    %v20 = vld [vmem:[%s0] sm:$0xff]
    %v21 = vld [vmem:[%s1] sm:$0xff]
    %v22 = vld [vmem:[%s3 + $0x52] sm:$0x1]
    %v23 = vlaneseq
    %v24 = vshrl.u32 %v23, 7
    %v25 = vsub.s32 0, %v24
    %v26 = vrot.slane %v22, %v25
    %v27 = vadd.f32 %v21, %v26
    %v28 = vld [vmem:[%s2] sm:$0xff]
    %v29 = vld [vmem:[%s2 + $0x8] sm:$0xff]
    %v30 = vld [vmem:[%s2 + $0x10] sm:$0xff]
    %v31 = vld [vmem:[%s2 + $0x18] sm:$0xff]
    %v32 = vld [vmem:[%s2 + $0x20] sm:$0xff]
    %v33 = vld [vmem:[%s2 + $0x28] sm:$0xff]
    %v34 = vld [vmem:[%s2 + $0x30] sm:$0x1]
    %v35 = vld [vmem:[%s2 + $0x31] sm:$0x1]
    %v36 = vld [vmem:[%s3] sm:$0xff]
    %v37 = vld [vmem:[%s3 + $0x8] sm:$0xff]
    %v38 = vld [vmem:[%s3 + $0x10] sm:$0xff]
    %v39 = vld [vmem:[%s3 + $0x18] sm:$0xff]
    %v40 = vld [vmem:[%s3 + $0x20] sm:$0xff]
    %v41 = vld [vmem:[%s3 + $0x28] sm:$0xff]
    %v42 = vld [vmem:[%s3 + $0x30] sm:$0xff]
    %v43 = vld [vmem:[%s3 + $0x38] sm:$0xff]
    %v44 = vld [vmem:[%s3 + $0x40] sm:$0xff]
    %v45 = vld [vmem:[%s3 + $0x48] sm:$0xff]
    %v46 = vld [vmem:[%s3 + $0x50] sm:$0x1]
    %v47 = vld [vmem:[%s3 + $0x51] sm:$0x1]
    %v48 = vlaneseq
    %v49 = vshrl.u32 %v48, 7
    %v50 = vsub.s32 0, %v49
    %v51 = vrot.slane %v34, %v50
    %vm52 = vcmask 130048
    %v54 = vsel %vm52, %v20, 0
    %56 = vmatprep.subr.mxu0 0.0
    %57 = vmatpush1.msra.mxu0 %v28
    %58 = vmatprep.subr.mxu0 0.0
    %59 = vmatpush1.msra.mxu0 %v29
    %60 = vmatprep.subr.mxu0 0.0
    %61 = vmatpush1.msra.mxu0 0.0
    %62 = vmatprep.subr.mxu0 0.0
    %63 = vmatpush1.msra.mxu0 0.0
    %64 = vmatprep.subr.mxu0 0.0
    %65 = vmatpush1.msra.mxu0 0.0
    %66 = vmatprep.subr.mxu0 0.0
    %67 = vmatpush1.msra.mxu0 0.0
    %68 = vmatprep.subr.mxu0 0.0
    %69 = vmatpush1.msra.mxu0 0.0
    %70 = vmatprep.subr.mxu0 0.0
    %71 = vmatpush1.msra.mxu0 0.0
    %72 = vmatprep.subr.mxu0 0.0
    %73 = vmatpush1.msra.mxu0 0.0
    %74 = vmatprep.subr.mxu0 0.0
    %75 = vmatpush1.msra.mxu0 0.0
    %76 = vmatprep.subr.mxu0 0.0
    %77 = vmatpush1.msra.mxu0 0.0
    %78 = vmatprep.subr.mxu0 0.0
    %79 = vmatpush1.msra.mxu0 0.0
    %80 = vmatprep.subr.mxu0 0.0
    %81 = vmatpush1.msra.mxu0 0.0
    %82 = vmatprep.subr.mxu0 0.0
    %83 = vmatpush1.msra.mxu0 0.0
    %84 = vmatprep.subr.mxu0 0.0
    %85 = vmatpush1.msra.mxu0 0.0
    %86 = vmatprep.subr.mxu0 0.0
    %87 = vmatpush1.msra.mxu0 0.0
    %88 = vmatprep.subr.mxu0 0.0
    %89 = vmatpush1.msra.mxu0 0.0
    %90 = vmatprep.subr.mxu0 0.0
    %91 = vmatpush1.msra.mxu0 0.0
    %92 = vmatprep.subr.mxu0 0.0
    %93 = vmatpush1.msra.mxu0 0.0
    %94 = vmatprep.subr.mxu0 0.0
    %95 = vmatpush1.msra.mxu0 0.0
    %96 = vmatprep.subr.mxu0 0.0
    %97 = vmatpush1.msra.mxu0 0.0
    %98 = vmatprep.subr.mxu0 0.0
    %99 = vmatpush1.msra.mxu0 0.0
    %100 = vmatprep.subr.mxu0 0.0
    %101 = vmatpush1.msra.mxu0 0.0
    %102 = vmatprep.subr.mxu0 0.0
    %103 = vmatpush1.msra.mxu0 0.0
    %104 = vmatprep.subr.mxu0 0.0
    %105 = vmatpush1.msra.mxu0 0.0
    %106 = vmatprep.subr.mxu0 0.0
    %107 = vmatpush1.msra.mxu0 0.0
    %108 = vmatprep.subr.mxu0 0.0
    %109 = vmatpush1.msra.mxu0 0.0
    %110 = vmatprep.subr.mxu0 0.0
    %111 = vmatpush1.msra.mxu0 0.0
    %112 = vmatprep.subr.mxu0 0.0
    %113 = vmatpush1.msra.mxu0 0.0
    %114 = vmatprep.subr.mxu0 0.0
    %115 = vmatpush1.msra.mxu0 0.0
    %116 = vmatprep.subr.mxu0 0.0
    %117 = vmatpush1.msra.mxu0 0.0
    %118 = vmatprep.subr.mxu0 0.0
    %119 = vmatpush1.msra.mxu0 0.0
    %120 = vmatprep.mubr.f32.mxu0 0.0
    %121 = vmatmul.mubr.f32.gmra.mrb[0].mxu0 %v54
    %v122 = vpop.f32.mrb[0].mxu0
    %v123 = vadd.f32 %v51, %v122
    %v124 = vpop.f32.mrb[0].mxu0
    %125 = vdwg.mxu0
    %v126 = vmax.f32 %v123, 0.0
    %v127 = vlaneseq
    %v128 = vshrl.u32 %v127, 7
    %v129 = vsub.s32 0, %v128
    %v130 = vrot.slane %v35, %v129
    %vm131 = vcmask 261120
    %v133 = vsel %vm131, %v126, 0
    %135 = vmatprep.subr.mxu0 0.0
    %136 = vmatpush1.msra.mxu0 %v30
    %137 = vmatprep.subr.mxu0 0.0
    %138 = vmatpush1.msra.mxu0 %v31
    %139 = vmatprep.subr.mxu0 0.0
    %140 = vmatpush1.msra.mxu0 %v32
    %141 = vmatprep.subr.mxu0 0.0
    %142 = vmatpush1.msra.mxu0 %v33
    %143 = vmatprep.subr.mxu0 0.0
    %144 = vmatpush1.msra.mxu0 0.0
    %145 = vmatprep.subr.mxu0 0.0
    %146 = vmatpush1.msra.mxu0 0.0
    %147 = vmatprep.subr.mxu0 0.0
    %148 = vmatpush1.msra.mxu0 0.0
    %149 = vmatprep.subr.mxu0 0.0
    %150 = vmatpush1.msra.mxu0 0.0
    %151 = vmatprep.subr.mxu0 0.0
    %152 = vmatpush1.msra.mxu0 0.0
    %153 = vmatprep.subr.mxu0 0.0
    %154 = vmatpush1.msra.mxu0 0.0
    %155 = vmatprep.subr.mxu0 0.0
    %156 = vmatpush1.msra.mxu0 0.0
    %157 = vmatprep.subr.mxu0 0.0
    %158 = vmatpush1.msra.mxu0 0.0
    %159 = vmatprep.subr.mxu0 0.0
    %160 = vmatpush1.msra.mxu0 0.0
    %161 = vmatprep.subr.mxu0 0.0
    %162 = vmatpush1.msra.mxu0 0.0
    %163 = vmatprep.subr.mxu0 0.0
    %164 = vmatpush1.msra.mxu0 0.0
    %165 = vmatprep.subr.mxu0 0.0
    %166 = vmatpush1.msra.mxu0 0.0
    %167 = vmatprep.subr.mxu0 0.0
    %168 = vmatpush1.msra.mxu0 0.0
    %169 = vmatprep.subr.mxu0 0.0
    %170 = vmatpush1.msra.mxu0 0.0
    %171 = vmatprep.subr.mxu0 0.0
    %172 = vmatpush1.msra.mxu0 0.0
    %173 = vmatprep.subr.mxu0 0.0
    %174 = vmatpush1.msra.mxu0 0.0
    %175 = vmatprep.subr.mxu0 0.0
    %176 = vmatpush1.msra.mxu0 0.0
    %177 = vmatprep.subr.mxu0 0.0
    %178 = vmatpush1.msra.mxu0 0.0
    %179 = vmatprep.subr.mxu0 0.0
    %180 = vmatpush1.msra.mxu0 0.0
    %181 = vmatprep.subr.mxu0 0.0
    %182 = vmatpush1.msra.mxu0 0.0
    %183 = vmatprep.subr.mxu0 0.0
    %184 = vmatpush1.msra.mxu0 0.0
    %185 = vmatprep.subr.mxu0 0.0
    %186 = vmatpush1.msra.mxu0 0.0
    %187 = vmatprep.subr.mxu0 0.0
    %188 = vmatpush1.msra.mxu0 0.0
    %189 = vmatprep.subr.mxu0 0.0
    %190 = vmatpush1.msra.mxu0 0.0
    %191 = vmatprep.subr.mxu0 0.0
    %192 = vmatpush1.msra.mxu0 0.0
    %193 = vmatprep.subr.mxu0 0.0
    %194 = vmatpush1.msra.mxu0 0.0
    %195 = vmatprep.subr.mxu0 0.0
    %196 = vmatpush1.msra.mxu0 0.0
    %197 = vmatprep.subr.mxu0 0.0
    %198 = vmatpush1.msra.mxu0 0.0
    %199 = vmatprep.mubr.f32.mxu0 0.0
    %200 = vmatmul.mubr.f32.gmra.mrb[0].mxu0 %v133
    %v201 = vpop.f32.mrb[0].mxu0
    %v202 = vadd.f32 %v130, %v201
    %v203 = vpop.f32.mrb[0].mxu0
    %204 = vdwg.mxu0
    %v205 = vmax.f32 %v202, 0.0
    %v207 = vsel %vm131, %v205, 0
    %209 = vmatprep.subr.mxu0 0.0
    %210 = vmatpush1.msra.mxu0 %v38
    %211 = vmatprep.subr.mxu0 0.0
    %212 = vmatpush1.msra.mxu0 %v39
    %213 = vmatprep.subr.mxu0 0.0
    %214 = vmatpush1.msra.mxu0 %v40
    %215 = vmatprep.subr.mxu0 0.0
    %216 = vmatpush1.msra.mxu0 %v41
    %217 = vmatprep.subr.mxu0 0.0
    %218 = vmatpush1.msra.mxu0 0.0
    %219 = vmatprep.subr.mxu0 0.0
    %220 = vmatpush1.msra.mxu0 0.0
    %221 = vmatprep.subr.mxu0 0.0
    %222 = vmatpush1.msra.mxu0 0.0
    %223 = vmatprep.subr.mxu0 0.0
    %224 = vmatpush1.msra.mxu0 0.0
    %225 = vmatprep.subr.mxu0 0.0
    %226 = vmatpush1.msra.mxu0 0.0
    %227 = vmatprep.subr.mxu0 0.0
    %228 = vmatpush1.msra.mxu0 0.0
    %229 = vmatprep.subr.mxu0 0.0
    %230 = vmatpush1.msra.mxu0 0.0
    %231 = vmatprep.subr.mxu0 0.0
    %232 = vmatpush1.msra.mxu0 0.0
    %233 = vmatprep.subr.mxu0 0.0
    %234 = vmatpush1.msra.mxu0 0.0
    %235 = vmatprep.subr.mxu0 0.0
    %236 = vmatpush1.msra.mxu0 0.0
    %237 = vmatprep.subr.mxu0 0.0
    %238 = vmatpush1.msra.mxu0 0.0
    %239 = vmatprep.subr.mxu0 0.0
    %240 = vmatpush1.msra.mxu0 0.0
    %241 = vmatprep.subr.mxu0 0.0
    %242 = vmatpush1.msra.mxu0 0.0
    %243 = vmatprep.subr.mxu0 0.0
    %244 = vmatpush1.msra.mxu0 0.0
    %245 = vmatprep.subr.mxu0 0.0
    %246 = vmatpush1.msra.mxu0 0.0
    %247 = vmatprep.subr.mxu0 0.0
    %248 = vmatpush1.msra.mxu0 0.0
    %249 = vmatprep.subr.mxu0 0.0
    %250 = vmatpush1.msra.mxu0 0.0
    %251 = vmatprep.subr.mxu0 0.0
    %252 = vmatpush1.msra.mxu0 0.0
    %253 = vmatprep.subr.mxu0 0.0
    %254 = vmatpush1.msra.mxu0 0.0
    %255 = vmatprep.subr.mxu0 0.0
    %256 = vmatpush1.msra.mxu0 0.0
    %257 = vmatprep.subr.mxu0 0.0
    %258 = vmatpush1.msra.mxu0 0.0
    %259 = vmatprep.subr.mxu0 0.0
    %260 = vmatpush1.msra.mxu0 0.0
    %261 = vmatprep.subr.mxu0 0.0
    %262 = vmatpush1.msra.mxu0 0.0
    %263 = vmatprep.subr.mxu0 0.0
    %264 = vmatpush1.msra.mxu0 0.0
    %265 = vmatprep.subr.mxu0 0.0
    %266 = vmatpush1.msra.mxu0 0.0
    %267 = vmatprep.subr.mxu0 0.0
    %268 = vmatpush1.msra.mxu0 0.0
    %269 = vmatprep.subr.mxu0 0.0
    %270 = vmatpush1.msra.mxu0 0.0
    %271 = vmatprep.subr.mxu0 0.0
    %272 = vmatpush1.msra.mxu0 0.0
    %273 = vmatprep.mubr.f32.mxu0 0.0
    %274 = vmatmul.mubr.f32.gmra.mrb[0].mxu0 %v207
    %v275 = vpop.f32.mrb[0].mxu0
    %v276 = vadd.f32 0.0, %v275
    %v277 = vpop.f32.mrb[0].mxu0
    %278 = vdwg.mxu0
    %279 = vmatprep.subr.mxu0 0.0
    %280 = vmatpush1.msra.mxu0 %v36
    %281 = vmatprep.subr.mxu0 0.0
    %282 = vmatpush1.msra.mxu0 %v37
    %283 = vmatprep.subr.mxu0 0.0
    %284 = vmatpush1.msra.mxu0 0.0
    %285 = vmatprep.subr.mxu0 0.0
    %286 = vmatpush1.msra.mxu0 0.0
    %287 = vmatprep.subr.mxu0 0.0
    %288 = vmatpush1.msra.mxu0 0.0
    %289 = vmatprep.subr.mxu0 0.0
    %290 = vmatpush1.msra.mxu0 0.0
    %291 = vmatprep.subr.mxu0 0.0
    %292 = vmatpush1.msra.mxu0 0.0
    %293 = vmatprep.subr.mxu0 0.0
    %294 = vmatpush1.msra.mxu0 0.0
    %295 = vmatprep.subr.mxu0 0.0
    %296 = vmatpush1.msra.mxu0 0.0
    %297 = vmatprep.subr.mxu0 0.0
    %298 = vmatpush1.msra.mxu0 0.0
    %299 = vmatprep.subr.mxu0 0.0
    %300 = vmatpush1.msra.mxu0 0.0
    %301 = vmatprep.subr.mxu0 0.0
    %302 = vmatpush1.msra.mxu0 0.0
    %303 = vmatprep.subr.mxu0 0.0
    %304 = vmatpush1.msra.mxu0 0.0
    %305 = vmatprep.subr.mxu0 0.0
    %306 = vmatpush1.msra.mxu0 0.0
    %307 = vmatprep.subr.mxu0 0.0
    %308 = vmatpush1.msra.mxu0 0.0
    %309 = vmatprep.subr.mxu0 0.0
    %310 = vmatpush1.msra.mxu0 0.0
    %311 = vmatprep.subr.mxu0 0.0
    %312 = vmatpush1.msra.mxu0 0.0
    %313 = vmatprep.subr.mxu0 0.0
    %314 = vmatpush1.msra.mxu0 0.0
    %315 = vmatprep.subr.mxu0 0.0
    %316 = vmatpush1.msra.mxu0 0.0
    %317 = vmatprep.subr.mxu0 0.0
    %318 = vmatpush1.msra.mxu0 0.0
    %319 = vmatprep.subr.mxu0 0.0
    %320 = vmatpush1.msra.mxu0 0.0
    %321 = vmatprep.subr.mxu0 0.0
    %322 = vmatpush1.msra.mxu0 0.0
    %323 = vmatprep.subr.mxu0 0.0
    %324 = vmatpush1.msra.mxu0 0.0
    %325 = vmatprep.subr.mxu0 0.0
    %326 = vmatpush1.msra.mxu0 0.0
    %327 = vmatprep.subr.mxu0 0.0
    %328 = vmatpush1.msra.mxu0 0.0
    %329 = vmatprep.subr.mxu0 0.0
    %330 = vmatpush1.msra.mxu0 0.0
    %331 = vmatprep.subr.mxu0 0.0
    %332 = vmatpush1.msra.mxu0 0.0
    %333 = vmatprep.subr.mxu0 0.0
    %334 = vmatpush1.msra.mxu0 0.0
    %335 = vmatprep.subr.mxu0 0.0
    %336 = vmatpush1.msra.mxu0 0.0
    %337 = vmatprep.subr.mxu0 0.0
    %338 = vmatpush1.msra.mxu0 0.0
    %339 = vmatprep.subr.mxu0 0.0
    %340 = vmatpush1.msra.mxu0 0.0
    %341 = vmatprep.subr.mxu0 0.0
    %342 = vmatpush1.msra.mxu0 0.0
    %343 = vmatprep.mubr.f32.mxu0 0.0
    %344 = vmatmul.mubr.f32.gmra.mrb[0].mxu0 %v54
    %v345 = vpop.f32.mrb[0].mxu0
    %v346 = vadd.f32 %v276, %v345
    %v347 = vpop.f32.mrb[0].mxu0
    %348 = vdwg.mxu0
    %v349 = vlaneseq
    %v350 = vshrl.u32 %v349, 7
    %v351 = vsub.s32 0, %v350
    %v352 = vrot.slane %v46, %v351
    %v353 = vadd.f32 %v346, %v352
    %v354 = vlaneseq
    %v355 = vshrl.u32 %v354, 7
    %v356 = vsub.s32 0, %v355
    %v357 = vrot.slane %v47, %v356
    %358 = vmatprep.subr.mxu0 0.0
    %359 = vmatpush1.msra.mxu0 %v42
    %360 = vmatprep.subr.mxu0 0.0
    %361 = vmatpush1.msra.mxu0 %v43
    %362 = vmatprep.subr.mxu0 0.0
    %363 = vmatpush1.msra.mxu0 %v44
    %364 = vmatprep.subr.mxu0 0.0
    %365 = vmatpush1.msra.mxu0 %v45
    %366 = vmatprep.subr.mxu0 0.0
    %367 = vmatpush1.msra.mxu0 0.0
    %368 = vmatprep.subr.mxu0 0.0
    %369 = vmatpush1.msra.mxu0 0.0
    %370 = vmatprep.subr.mxu0 0.0
    %371 = vmatpush1.msra.mxu0 0.0
    %372 = vmatprep.subr.mxu0 0.0
    %373 = vmatpush1.msra.mxu0 0.0
    %374 = vmatprep.subr.mxu0 0.0
    %375 = vmatpush1.msra.mxu0 0.0
    %376 = vmatprep.subr.mxu0 0.0
    %377 = vmatpush1.msra.mxu0 0.0
    %378 = vmatprep.subr.mxu0 0.0
    %379 = vmatpush1.msra.mxu0 0.0
    %380 = vmatprep.subr.mxu0 0.0
    %381 = vmatpush1.msra.mxu0 0.0
    %382 = vmatprep.subr.mxu0 0.0
    %383 = vmatpush1.msra.mxu0 0.0
    %384 = vmatprep.subr.mxu0 0.0
    %385 = vmatpush1.msra.mxu0 0.0
    %386 = vmatprep.subr.mxu0 0.0
    %387 = vmatpush1.msra.mxu0 0.0
    %388 = vmatprep.subr.mxu0 0.0
    %389 = vmatpush1.msra.mxu0 0.0
    %390 = vmatprep.subr.mxu0 0.0
    %391 = vmatpush1.msra.mxu0 0.0
    %392 = vmatprep.subr.mxu0 0.0
    %393 = vmatpush1.msra.mxu0 0.0
    %394 = vmatprep.subr.mxu0 0.0
    %395 = vmatpush1.msra.mxu0 0.0
    %396 = vmatprep.subr.mxu0 0.0
    %397 = vmatpush1.msra.mxu0 0.0
    %398 = vmatprep.subr.mxu0 0.0
    %399 = vmatpush1.msra.mxu0 0.0
    %400 = vmatprep.subr.mxu0 0.0
    %401 = vmatpush1.msra.mxu0 0.0
    %402 = vmatprep.subr.mxu0 0.0
    %403 = vmatpush1.msra.mxu0 0.0
    %404 = vmatprep.subr.mxu0 0.0
    %405 = vmatpush1.msra.mxu0 0.0
    %406 = vmatprep.subr.mxu0 0.0
    %407 = vmatpush1.msra.mxu0 0.0
    %408 = vmatprep.subr.mxu0 0.0
    %409 = vmatpush1.msra.mxu0 0.0
    %410 = vmatprep.subr.mxu0 0.0
    %411 = vmatpush1.msra.mxu0 0.0
    %412 = vmatprep.subr.mxu0 0.0
    %413 = vmatpush1.msra.mxu0 0.0
    %414 = vmatprep.subr.mxu0 0.0
    %415 = vmatpush1.msra.mxu0 0.0
    %416 = vmatprep.subr.mxu0 0.0
    %417 = vmatpush1.msra.mxu0 0.0
    %418 = vmatprep.subr.mxu0 0.0
    %419 = vmatpush1.msra.mxu0 0.0
    %420 = vmatprep.subr.mxu0 0.0
    %421 = vmatpush1.msra.mxu0 0.0
    %422 = vmatprep.mubr.f32.mxu0 0.0
    %423 = vmatmul.mubr.f32.gmra.mrb[0].mxu0 %v207
    %v424 = vpop.f32.mrb[0].mxu0
    %v425 = vadd.f32 %v357, %v424
    %v426 = vpop.f32.mrb[0].mxu0
    %427 = vdwg.mxu0
    %v428 = vxor.u32 %v425, 2147483648
    %v429 = vmul.f32 %v428, 1.442695
    %v430 = vpow.pop %v429
    %v431 = vadd.f32 %v430, 1.0
    %v432 = vrcp.pop %v431
    %v433 = vmul.f32 1.0, %v432
    %v434 = vmin.f32 %v425, 0.0
    %v435 = vand.u32 2147483647, %v425
    %v436 = vsub.f32 0.0, %v435
    %v437 = vmul.f32 %v436, 1.442695
    %v438 = vpow.pop %v437
    %v439 = vadd.f32 %v438, 1.0
    %v440 = vlog2.pop %v439
    %v441 = vmul.f32 %v440, 0.6931472
    %v442 = vsub.f32 %v434, %v441
    %v443 = vmul.f32 %v353, %v433
    %v444 = vsel %vm52, %v442, 0.0
    %445 = vadd.xlane.f32.xlu0 %v444
    %v446 = vpop.xlane.xlu0 %445
    %v447 = vadd.f32 %v27, %v446
    %v448 = vld [vmem:[%s2 + $0x38] sm:$0xff]
    %v449 = vld [vmem:[%s2 + $0x40] sm:$0xff]
    %v450 = vld [vmem:[%s2 + $0x48] sm:$0xff]
    %v451 = vld [vmem:[%s2 + $0x50] sm:$0xff]
    %v452 = vld [vmem:[%s2 + $0x58] sm:$0xff]
    %v453 = vld [vmem:[%s2 + $0x60] sm:$0xff]
    %v454 = vld [vmem:[%s2 + $0x68] sm:$0x1]
    %v455 = vld [vmem:[%s2 + $0x69] sm:$0x1]
    %v456 = vld [vmem:[%s3 + $0x58] sm:$0xff]
    %v457 = vld [vmem:[%s3 + $0x60] sm:$0xff]
    %v458 = vld [vmem:[%s3 + $0x68] sm:$0xff]
    %v459 = vld [vmem:[%s3 + $0x70] sm:$0xff]
    %v460 = vld [vmem:[%s3 + $0x78] sm:$0xff]
    %v461 = vld [vmem:[%s3 + $0x80] sm:$0xff]
    %v462 = vld [vmem:[%s3 + $0x88] sm:$0xff]
    %v463 = vld [vmem:[%s3 + $0x90] sm:$0xff]
    %v464 = vld [vmem:[%s3 + $0x98] sm:$0xff]
    %v465 = vld [vmem:[%s3 + $0xa0] sm:$0xff]
    %v466 = vld [vmem:[%s3 + $0xa8] sm:$0x1]
    %v467 = vld [vmem:[%s3 + $0xa9] sm:$0x1]
    %v468 = vlaneseq
    %v469 = vshrl.u32 %v468, 7
    %v470 = vsub.s32 0, %v469
    %v471 = vrot.slane %v454, %v470
    %v473 = vsel %vm52, %v443, 0
    %475 = vmatprep.subr.mxu0 0.0
    %476 = vmatpush1.msra.mxu0 %v448
    %477 = vmatprep.subr.mxu0 0.0
    %478 = vmatpush1.msra.mxu0 %v449
    %479 = vmatprep.subr.mxu0 0.0
    %480 = vmatpush1.msra.mxu0 0.0
    %481 = vmatprep.subr.mxu0 0.0
    %482 = vmatpush1.msra.mxu0 0.0
    %483 = vmatprep.subr.mxu0 0.0
    %484 = vmatpush1.msra.mxu0 0.0
    %485 = vmatprep.subr.mxu0 0.0
    %486 = vmatpush1.msra.mxu0 0.0
    %487 = vmatprep.subr.mxu0 0.0
    %488 = vmatpush1.msra.mxu0 0.0
    %489 = vmatprep.subr.mxu0 0.0
    %490 = vmatpush1.msra.mxu0 0.0
    %491 = vmatprep.subr.mxu0 0.0
    %492 = vmatpush1.msra.mxu0 0.0
    %493 = vmatprep.subr.mxu0 0.0
    %494 = vmatpush1.msra.mxu0 0.0
    %495 = vmatprep.subr.mxu0 0.0
    %496 = vmatpush1.msra.mxu0 0.0
    %497 = vmatprep.subr.mxu0 0.0
    %498 = vmatpush1.msra.mxu0 0.0
    %499 = vmatprep.subr.mxu0 0.0
    %500 = vmatpush1.msra.mxu0 0.0
    %501 = vmatprep.subr.mxu0 0.0
    %502 = vmatpush1.msra.mxu0 0.0
    %503 = vmatprep.subr.mxu0 0.0
    %504 = vmatpush1.msra.mxu0 0.0
    %505 = vmatprep.subr.mxu0 0.0
    %506 = vmatpush1.msra.mxu0 0.0
    %507 = vmatprep.subr.mxu0 0.0
    %508 = vmatpush1.msra.mxu0 0.0
    %509 = vmatprep.subr.mxu0 0.0
    %510 = vmatpush1.msra.mxu0 0.0
    %511 = vmatprep.subr.mxu0 0.0
    %512 = vmatpush1.msra.mxu0 0.0
    %513 = vmatprep.subr.mxu0 0.0
    %514 = vmatpush1.msra.mxu0 0.0
    %515 = vmatprep.subr.mxu0 0.0
    %516 = vmatpush1.msra.mxu0 0.0
    %517 = vmatprep.subr.mxu0 0.0
    %518 = vmatpush1.msra.mxu0 0.0
    %519 = vmatprep.subr.mxu0 0.0
    %520 = vmatpush1.msra.mxu0 0.0
    %521 = vmatprep.subr.mxu0 0.0
    %522 = vmatpush1.msra.mxu0 0.0
    %523 = vmatprep.subr.mxu0 0.0
    %524 = vmatpush1.msra.mxu0 0.0
    %525 = vmatprep.subr.mxu0 0.0
    %526 = vmatpush1.msra.mxu0 0.0
    %527 = vmatprep.subr.mxu0 0.0
    %528 = vmatpush1.msra.mxu0 0.0
    %529 = vmatprep.subr.mxu0 0.0
    %530 = vmatpush1.msra.mxu0 0.0
    %531 = vmatprep.subr.mxu0 0.0
    %532 = vmatpush1.msra.mxu0 0.0
    %533 = vmatprep.subr.mxu0 0.0
    %534 = vmatpush1.msra.mxu0 0.0
    %535 = vmatprep.subr.mxu0 0.0
    %536 = vmatpush1.msra.mxu0 0.0
    %537 = vmatprep.subr.mxu0 0.0
    %538 = vmatpush1.msra.mxu0 0.0
    %539 = vmatprep.mubr.f32.mxu0 0.0
    %540 = vmatmul.mubr.f32.gmra.mrb[0].mxu0 %v473
    %v541 = vpop.f32.mrb[0].mxu0
    %v542 = vadd.f32 %v471, %v541
    %v543 = vpop.f32.mrb[0].mxu0
    %544 = vdwg.mxu0
    %v545 = vmax.f32 %v542, 0.0
    %v546 = vlaneseq
    %v547 = vshrl.u32 %v546, 7
    %v548 = vsub.s32 0, %v547
    %v549 = vrot.slane %v455, %v548
    %v551 = vsel %vm131, %v545, 0
    %553 = vmatprep.subr.mxu0 0.0
    %554 = vmatpush1.msra.mxu0 %v450
    %555 = vmatprep.subr.mxu0 0.0
    %556 = vmatpush1.msra.mxu0 %v451
    %557 = vmatprep.subr.mxu0 0.0
    %558 = vmatpush1.msra.mxu0 %v452
    %559 = vmatprep.subr.mxu0 0.0
    %560 = vmatpush1.msra.mxu0 %v453
    %561 = vmatprep.subr.mxu0 0.0
    %562 = vmatpush1.msra.mxu0 0.0
    %563 = vmatprep.subr.mxu0 0.0
    %564 = vmatpush1.msra.mxu0 0.0
    %565 = vmatprep.subr.mxu0 0.0
    %566 = vmatpush1.msra.mxu0 0.0
    %567 = vmatprep.subr.mxu0 0.0
    %568 = vmatpush1.msra.mxu0 0.0
    %569 = vmatprep.subr.mxu0 0.0
    %570 = vmatpush1.msra.mxu0 0.0
    %571 = vmatprep.subr.mxu0 0.0
    %572 = vmatpush1.msra.mxu0 0.0
    %573 = vmatprep.subr.mxu0 0.0
    %574 = vmatpush1.msra.mxu0 0.0
    %575 = vmatprep.subr.mxu0 0.0
    %576 = vmatpush1.msra.mxu0 0.0
    %577 = vmatprep.subr.mxu0 0.0
    %578 = vmatpush1.msra.mxu0 0.0
    %579 = vmatprep.subr.mxu0 0.0
    %580 = vmatpush1.msra.mxu0 0.0
    %581 = vmatprep.subr.mxu0 0.0
    %582 = vmatpush1.msra.mxu0 0.0
    %583 = vmatprep.subr.mxu0 0.0
    %584 = vmatpush1.msra.mxu0 0.0
    %585 = vmatprep.subr.mxu0 0.0
    %586 = vmatpush1.msra.mxu0 0.0
    %587 = vmatprep.subr.mxu0 0.0
    %588 = vmatpush1.msra.mxu0 0.0
    %589 = vmatprep.subr.mxu0 0.0
    %590 = vmatpush1.msra.mxu0 0.0
    %591 = vmatprep.subr.mxu0 0.0
    %592 = vmatpush1.msra.mxu0 0.0
    %593 = vmatprep.subr.mxu0 0.0
    %594 = vmatpush1.msra.mxu0 0.0
    %595 = vmatprep.subr.mxu0 0.0
    %596 = vmatpush1.msra.mxu0 0.0
    %597 = vmatprep.subr.mxu0 0.0
    %598 = vmatpush1.msra.mxu0 0.0
    %599 = vmatprep.subr.mxu0 0.0
    %600 = vmatpush1.msra.mxu0 0.0
    %601 = vmatprep.subr.mxu0 0.0
    %602 = vmatpush1.msra.mxu0 0.0
    %603 = vmatprep.subr.mxu0 0.0
    %604 = vmatpush1.msra.mxu0 0.0
    %605 = vmatprep.subr.mxu0 0.0
    %606 = vmatpush1.msra.mxu0 0.0
    %607 = vmatprep.subr.mxu0 0.0
    %608 = vmatpush1.msra.mxu0 0.0
    %609 = vmatprep.subr.mxu0 0.0
    %610 = vmatpush1.msra.mxu0 0.0
    %611 = vmatprep.subr.mxu0 0.0
    %612 = vmatpush1.msra.mxu0 0.0
    %613 = vmatprep.subr.mxu0 0.0
    %614 = vmatpush1.msra.mxu0 0.0
    %615 = vmatprep.subr.mxu0 0.0
    %616 = vmatpush1.msra.mxu0 0.0
    %617 = vmatprep.mubr.f32.mxu0 0.0
    %618 = vmatmul.mubr.f32.gmra.mrb[0].mxu0 %v551
    %v619 = vpop.f32.mrb[0].mxu0
    %v620 = vadd.f32 %v549, %v619
    %v621 = vpop.f32.mrb[0].mxu0
    %622 = vdwg.mxu0
    %v623 = vmax.f32 %v620, 0.0
    %v625 = vsel %vm131, %v623, 0
    %627 = vmatprep.subr.mxu0 0.0
    %628 = vmatpush1.msra.mxu0 %v458
    %629 = vmatprep.subr.mxu0 0.0
    %630 = vmatpush1.msra.mxu0 %v459
    %631 = vmatprep.subr.mxu0 0.0
    %632 = vmatpush1.msra.mxu0 %v460
    %633 = vmatprep.subr.mxu0 0.0
    %634 = vmatpush1.msra.mxu0 %v461
    %635 = vmatprep.subr.mxu0 0.0
    %636 = vmatpush1.msra.mxu0 0.0
    %637 = vmatprep.subr.mxu0 0.0
    %638 = vmatpush1.msra.mxu0 0.0
    %639 = vmatprep.subr.mxu0 0.0
    %640 = vmatpush1.msra.mxu0 0.0
    %641 = vmatprep.subr.mxu0 0.0
    %642 = vmatpush1.msra.mxu0 0.0
    %643 = vmatprep.subr.mxu0 0.0
    %644 = vmatpush1.msra.mxu0 0.0
    %645 = vmatprep.subr.mxu0 0.0
    %646 = vmatpush1.msra.mxu0 0.0
    %647 = vmatprep.subr.mxu0 0.0
    %648 = vmatpush1.msra.mxu0 0.0
    %649 = vmatprep.subr.mxu0 0.0
    %650 = vmatpush1.msra.mxu0 0.0
    %651 = vmatprep.subr.mxu0 0.0
    %652 = vmatpush1.msra.mxu0 0.0
    %653 = vmatprep.subr.mxu0 0.0
    %654 = vmatpush1.msra.mxu0 0.0
    %655 = vmatprep.subr.mxu0 0.0
    %656 = vmatpush1.msra.mxu0 0.0
    %657 = vmatprep.subr.mxu0 0.0
    %658 = vmatpush1.msra.mxu0 0.0
    %659 = vmatprep.subr.mxu0 0.0
    %660 = vmatpush1.msra.mxu0 0.0
    %661 = vmatprep.subr.mxu0 0.0
    %662 = vmatpush1.msra.mxu0 0.0
    %663 = vmatprep.subr.mxu0 0.0
    %664 = vmatpush1.msra.mxu0 0.0
    %665 = vmatprep.subr.mxu0 0.0
    %666 = vmatpush1.msra.mxu0 0.0
    %667 = vmatprep.subr.mxu0 0.0
    %668 = vmatpush1.msra.mxu0 0.0
    %669 = vmatprep.subr.mxu0 0.0
    %670 = vmatpush1.msra.mxu0 0.0
    %671 = vmatprep.subr.mxu0 0.0
    %672 = vmatpush1.msra.mxu0 0.0
    %673 = vmatprep.subr.mxu0 0.0
    %674 = vmatpush1.msra.mxu0 0.0
    %675 = vmatprep.subr.mxu0 0.0
    %676 = vmatpush1.msra.mxu0 0.0
    %677 = vmatprep.subr.mxu0 0.0
    %678 = vmatpush1.msra.mxu0 0.0
    %679 = vmatprep.subr.mxu0 0.0
    %680 = vmatpush1.msra.mxu0 0.0
    %681 = vmatprep.subr.mxu0 0.0
    %682 = vmatpush1.msra.mxu0 0.0
    %683 = vmatprep.subr.mxu0 0.0
    %684 = vmatpush1.msra.mxu0 0.0
    %685 = vmatprep.subr.mxu0 0.0
    %686 = vmatpush1.msra.mxu0 0.0
    %687 = vmatprep.subr.mxu0 0.0
    %688 = vmatpush1.msra.mxu0 0.0
    %689 = vmatprep.subr.mxu0 0.0
    %690 = vmatpush1.msra.mxu0 0.0
    %691 = vmatprep.mubr.f32.mxu0 0.0
    %692 = vmatmul.mubr.f32.gmra.mrb[0].mxu0 %v625
    %v693 = vpop.f32.mrb[0].mxu0
    %v694 = vadd.f32 0.0, %v693
    %v695 = vpop.f32.mrb[0].mxu0
    %696 = vdwg.mxu0
    %697 = vmatprep.subr.mxu0 0.0
    %698 = vmatpush1.msra.mxu0 %v456
    %699 = vmatprep.subr.mxu0 0.0
    %700 = vmatpush1.msra.mxu0 %v457
    %701 = vmatprep.subr.mxu0 0.0
    %702 = vmatpush1.msra.mxu0 0.0
    %703 = vmatprep.subr.mxu0 0.0
    %704 = vmatpush1.msra.mxu0 0.0
    %705 = vmatprep.subr.mxu0 0.0
    %706 = vmatpush1.msra.mxu0 0.0
    %707 = vmatprep.subr.mxu0 0.0
    %708 = vmatpush1.msra.mxu0 0.0
    %709 = vmatprep.subr.mxu0 0.0
    %710 = vmatpush1.msra.mxu0 0.0
    %711 = vmatprep.subr.mxu0 0.0
    %712 = vmatpush1.msra.mxu0 0.0
    %713 = vmatprep.subr.mxu0 0.0
    %714 = vmatpush1.msra.mxu0 0.0
    %715 = vmatprep.subr.mxu0 0.0
    %716 = vmatpush1.msra.mxu0 0.0
    %717 = vmatprep.subr.mxu0 0.0
    %718 = vmatpush1.msra.mxu0 0.0
    %719 = vmatprep.subr.mxu0 0.0
    %720 = vmatpush1.msra.mxu0 0.0
    %721 = vmatprep.subr.mxu0 0.0
    %722 = vmatpush1.msra.mxu0 0.0
    %723 = vmatprep.subr.mxu0 0.0
    %724 = vmatpush1.msra.mxu0 0.0
    %725 = vmatprep.subr.mxu0 0.0
    %726 = vmatpush1.msra.mxu0 0.0
    %727 = vmatprep.subr.mxu0 0.0
    %728 = vmatpush1.msra.mxu0 0.0
    %729 = vmatprep.subr.mxu0 0.0
    %730 = vmatpush1.msra.mxu0 0.0
    %731 = vmatprep.subr.mxu0 0.0
    %732 = vmatpush1.msra.mxu0 0.0
    %733 = vmatprep.subr.mxu0 0.0
    %734 = vmatpush1.msra.mxu0 0.0
    %735 = vmatprep.subr.mxu0 0.0
    %736 = vmatpush1.msra.mxu0 0.0
    %737 = vmatprep.subr.mxu0 0.0
    %738 = vmatpush1.msra.mxu0 0.0
    %739 = vmatprep.subr.mxu0 0.0
    %740 = vmatpush1.msra.mxu0 0.0
    %741 = vmatprep.subr.mxu0 0.0
    %742 = vmatpush1.msra.mxu0 0.0
    %743 = vmatprep.subr.mxu0 0.0
    %744 = vmatpush1.msra.mxu0 0.0
    %745 = vmatprep.subr.mxu0 0.0
    %746 = vmatpush1.msra.mxu0 0.0
    %747 = vmatprep.subr.mxu0 0.0
    %748 = vmatpush1.msra.mxu0 0.0
    %749 = vmatprep.subr.mxu0 0.0
    %750 = vmatpush1.msra.mxu0 0.0
    %751 = vmatprep.subr.mxu0 0.0
    %752 = vmatpush1.msra.mxu0 0.0
    %753 = vmatprep.subr.mxu0 0.0
    %754 = vmatpush1.msra.mxu0 0.0
    %755 = vmatprep.subr.mxu0 0.0
    %756 = vmatpush1.msra.mxu0 0.0
    %757 = vmatprep.subr.mxu0 0.0
    %758 = vmatpush1.msra.mxu0 0.0
    %759 = vmatprep.subr.mxu0 0.0
    %760 = vmatpush1.msra.mxu0 0.0
    %761 = vmatprep.mubr.f32.mxu0 0.0
    %762 = vmatmul.mubr.f32.gmra.mrb[0].mxu0 %v473
    %v763 = vpop.f32.mrb[0].mxu0
    %v764 = vadd.f32 %v694, %v763
    %v765 = vpop.f32.mrb[0].mxu0
    %766 = vdwg.mxu0
    %v767 = vlaneseq
    %v768 = vshrl.u32 %v767, 7
    %v769 = vsub.s32 0, %v768
    %v770 = vrot.slane %v466, %v769
    %v771 = vadd.f32 %v764, %v770
    %v772 = vlaneseq
    %v773 = vshrl.u32 %v772, 7
    %v774 = vsub.s32 0, %v773
    %v775 = vrot.slane %v467, %v774
    %776 = vmatprep.subr.mxu0 0.0
    %777 = vmatpush1.msra.mxu0 %v462
    %778 = vmatprep.subr.mxu0 0.0
    %779 = vmatpush1.msra.mxu0 %v463
    %780 = vmatprep.subr.mxu0 0.0
    %781 = vmatpush1.msra.mxu0 %v464
    %782 = vmatprep.subr.mxu0 0.0
    %783 = vmatpush1.msra.mxu0 %v465
    %784 = vmatprep.subr.mxu0 0.0
    %785 = vmatpush1.msra.mxu0 0.0
    %786 = vmatprep.subr.mxu0 0.0
    %787 = vmatpush1.msra.mxu0 0.0
    %788 = vmatprep.subr.mxu0 0.0
    %789 = vmatpush1.msra.mxu0 0.0
    %790 = vmatprep.subr.mxu0 0.0
    %791 = vmatpush1.msra.mxu0 0.0
    %792 = vmatprep.subr.mxu0 0.0
    %793 = vmatpush1.msra.mxu0 0.0
    %794 = vmatprep.subr.mxu0 0.0
    %795 = vmatpush1.msra.mxu0 0.0
    %796 = vmatprep.subr.mxu0 0.0
    %797 = vmatpush1.msra.mxu0 0.0
    %798 = vmatprep.subr.mxu0 0.0
    %799 = vmatpush1.msra.mxu0 0.0
    %800 = vmatprep.subr.mxu0 0.0
    %801 = vmatpush1.msra.mxu0 0.0
    %802 = vmatprep.subr.mxu0 0.0
    %803 = vmatpush1.msra.mxu0 0.0
    %804 = vmatprep.subr.mxu0 0.0
    %805 = vmatpush1.msra.mxu0 0.0
    %806 = vmatprep.subr.mxu0 0.0
    %807 = vmatpush1.msra.mxu0 0.0
    %808 = vmatprep.subr.mxu0 0.0
    %809 = vmatpush1.msra.mxu0 0.0
    %810 = vmatprep.subr.mxu0 0.0
    %811 = vmatpush1.msra.mxu0 0.0
    %812 = vmatprep.subr.mxu0 0.0
    %813 = vmatpush1.msra.mxu0 0.0
    %814 = vmatprep.subr.mxu0 0.0
    %815 = vmatpush1.msra.mxu0 0.0
    %816 = vmatprep.subr.mxu0 0.0
    %817 = vmatpush1.msra.mxu0 0.0
    %818 = vmatprep.subr.mxu0 0.0
    %819 = vmatpush1.msra.mxu0 0.0
    %820 = vmatprep.subr.mxu0 0.0
    %821 = vmatpush1.msra.mxu0 0.0
    %822 = vmatprep.subr.mxu0 0.0
    %823 = vmatpush1.msra.mxu0 0.0
    %824 = vmatprep.subr.mxu0 0.0
    %825 = vmatpush1.msra.mxu0 0.0
    %826 = vmatprep.subr.mxu0 0.0
    %827 = vmatpush1.msra.mxu0 0.0
    %828 = vmatprep.subr.mxu0 0.0
    %829 = vmatpush1.msra.mxu0 0.0
    %830 = vmatprep.subr.mxu0 0.0
    %831 = vmatpush1.msra.mxu0 0.0
    %832 = vmatprep.subr.mxu0 0.0
    %833 = vmatpush1.msra.mxu0 0.0
    %834 = vmatprep.subr.mxu0 0.0
    %835 = vmatpush1.msra.mxu0 0.0
    %836 = vmatprep.subr.mxu0 0.0
    %837 = vmatpush1.msra.mxu0 0.0
    %838 = vmatprep.subr.mxu0 0.0
    %839 = vmatpush1.msra.mxu0 0.0
    %840 = vmatprep.mubr.f32.mxu0 0.0
    %841 = vmatmul.mubr.f32.gmra.mrb[0].mxu0 %v625
    %v842 = vpop.f32.mrb[0].mxu0
    %v843 = vadd.f32 %v775, %v842
    %v844 = vpop.f32.mrb[0].mxu0
    %845 = vdwg.mxu0
    %v846 = vxor.u32 %v843, 2147483648
    %v847 = vmul.f32 %v846, 1.442695
    %v848 = vpow.pop %v847
    %v849 = vadd.f32 %v848, 1.0
    %v850 = vrcp.pop %v849
    %v851 = vmul.f32 1.0, %v850
    %v852 = vmin.f32 %v843, 0.0
    %v853 = vand.u32 2147483647, %v843
    %v854 = vsub.f32 0.0, %v853
    %v855 = vmul.f32 %v854, 1.442695
    %v856 = vpow.pop %v855
    %v857 = vadd.f32 %v856, 1.0
    %v858 = vlog2.pop %v857
    %v859 = vmul.f32 %v858, 0.6931472
    %v860 = vsub.f32 %v852, %v859
    %v861 = vmul.f32 %v771, %v851
    %v862 = vsel %vm52, %v860, 0.0
    %863 = vadd.xlane.f32.xlu0 %v862
    %v864 = vpop.xlane.xlu0 %863
    %v865 = vadd.f32 %v447, %v864
    %866 = vst.msk [vmem:[#allocation2] sm:$0xff] %vm52, %v861
    %vm867 = vcmask 7168
    %868 = vst.msk [vmem:[%s5] sm:$0xff] %vm867, %v865
    // Predicated region
    $region18: #{revnet2d_forward_fused.1} parent=1 // pred_check
      _
    $region19: #{revnet2d_forward_fused.1} parent=1 // pred_check_branch
      %870 = sbr.rel (0) target = $region21
    $region20: #{revnet2d_forward_fused.1} parent=1 // pred_region
      %s872 = ssub.s32 128, 128
      %873 = vsyncadd [#allocation3], %s872
      %s875 = sshll.u32 [#allocation2], 4
      %s876 = int_to_ptr.vmem [resolvable:$true] %s875
      %878 = dma.vmem_to_hbm [thread:$0]  %s876, 128, %s4, [#allocation3]
    $region21: #{revnet2d_forward_fused.1} parent=1 // pred_fallthru
      _
    // Predicated region
    $region22: #{revnet2d_forward_fused.1} parent=1 // pred_check
      _
    $region23: #{revnet2d_forward_fused.1} parent=1 // pred_check_branch
      %880 = sbr.rel (0) target = $region25
    $region24: #{revnet2d_forward_fused.1} parent=1 // pred_region
      _
    $region25: #{revnet2d_forward_fused.1} parent=1 // pred_fallthru
      _
    // Predicated region
    $region26: #{revnet2d_forward_fused.1} parent=1 // pred_check
      _
    $region27: #{revnet2d_forward_fused.1} parent=1 // pred_check_branch
      %882 = sbr.rel (0) target = $region29
    $region28: #{revnet2d_forward_fused.1} parent=1 // pred_region
      %883 = dma.done [#allocation3], 128
    $region29: #{revnet2d_forward_fused.1} parent=1 // pred_fallthru
      _
    // Predicated region
    $region30: #{revnet2d_forward_fused.1} parent=1 // pred_check
      _
    $region31: #{revnet2d_forward_fused.1} parent=1 // pred_check_branch
      %885 = sbr.rel (0) target = $region33
    $region32: #{revnet2d_forward_fused.1} parent=1 // pred_region
      _
    $region33: #{revnet2d_forward_fused.1} parent=1 // pred_fallthru
      _
    %886 = vsyncpa [#allocation3], 1

</llo_original>
